<compile_context>
chip_gen: v7x
topology: tpu7x:2x2x1
jax: 0.10.0
libtpu: 0.0.40
codegen_flags: <defaults>
</compile_context>

<pallas_src>
import math

import jax
import jax.numpy as jnp
from jax.experimental import pallas as pl
from jax.experimental.pallas import tpu as pltpu

_LANES = 128
_TILE_BYTES = 2 * 1024 * 1024  # per-block budget; x4 (double-buffered in+out) fits
                               # the default scoped-VMEM limit on v5e/v6e/v7x.


def _zero_kernel(x_ref, o_ref):
    # Faithful to PyTorch `x * 0`: IEEE multiply, so NaN/Inf -> NaN.
    o_ref[...] = x_ref[...] * jnp.zeros((), dtype=x_ref.dtype)


def _row_tile(n_rows, row_bytes, itemsize):
    """Largest row tile within the VMEM budget, aligned to the packed sublane count."""
    sub = 8 * max(1, 4 // itemsize)           # 8 for f32, 16 for bf16, 32 for int8
    tm = max(1, _TILE_BYTES // max(1, row_bytes))
    tm = min(tm, n_rows)
    if tm < n_rows:
        # Interior blocks must satisfy the (8, 128) sublane constraint.
        tm = max(sub, (tm // sub) * sub)
    return tm


def _zero_2d(x2d):
    n, f = x2d.shape
    itemsize = jnp.dtype(x2d.dtype).itemsize
    tm = _row_tile(n, f * itemsize, itemsize)
    grid = (pl.cdiv(n, tm),)
    return pl.pallas_call(
        _zero_kernel,
        out_shape=jax.ShapeDtypeStruct((n, f), x2d.dtype),
        grid_spec=pltpu.PrefetchScalarGridSpec(
            num_scalar_prefetch=0,
            grid=grid,
            in_specs=[pl.BlockSpec((tm, f), lambda i: (i, 0))],
            out_specs=pl.BlockSpec((tm, f), lambda i: (i, 0)),
        ),
        compiler_params=pltpu.CompilerParams(
            dimension_semantics=("parallel",),  # lets v7x shard the grid over 2 TCs
        ),
    )(x2d)


def zero_op(x, edge_index=None):
    """Pallas equivalent of Zero.forward: returns x * 0 (same shape/dtype)."""
    orig_shape = x.shape
    total = math.prod(orig_shape) if orig_shape else 1
    if x.ndim == 0 or total == 0:
        # Degenerate shapes: nothing useful to tile.
        return x * jnp.zeros((), dtype=x.dtype)

    if total % _LANES == 0:
        # Lane-dense path: view as (total/128, 128) so the block last dim is a
        # full 128-lane width -> unmasked full-width stores.
        out = _zero_2d(x.reshape(total // _LANES, _LANES))
    else:
        # Ragged feature width: tile rows, keep the full feature dim per block.
        last = orig_shape[-1] if x.ndim >= 2 else total
        out = _zero_2d(x.reshape(total // last, last))
    return out.reshape(orig_shape)


if __name__ == "__main__":
    key = jax.random.PRNGKey(0)
    # GNN-style node features: 16 nodes, 32 features. Zero ignores edge_index.
    x = jax.random.normal(key, (16, 32), dtype=jnp.float32)
    edge_index = jnp.zeros((2, 8), dtype=jnp.int32)

    out = jax.block_until_ready(zero_op(x, edge_index))

    ref = x * 0  # PyTorch-equivalent reference
    assert out.shape == x.shape and out.dtype == x.dtype
    assert bool(jnp.all(out == ref))
    print("KERNEL_OK")
</pallas_src>

<mosaic_0001>
module attributes {stable_mosaic.version = 11 : i64} {
  func.func @_zero_kernel(%arg0: i32, %arg1: memref<4x128xf32, #tpu.memory_space<vmem>>, %arg2: memref<4x128xf32, #tpu.memory_space<vmem>>) attributes {dimension_semantics = [#tpu.dimension_semantics<parallel>], iteration_bounds = array<i64: 1>, scalar_prefetch = 0 : i64, scratch_operands = 0 : i64, tpu.core_type = #tpu.core_type<tc>, window_params = [{transform_indices = @transform_0, window_bounds = array<i64: 4, 128>}, {transform_indices = @transform_1, window_bounds = array<i64: 4, 128>}]} {
    %c0 = arith.constant 0 : index
    %c0_0 = arith.constant 0 : index
    %0 = vector.load %arg1[%c0, %c0_0] : memref<4x128xf32, #tpu.memory_space<vmem>>, vector<4x128xf32>
    %cst = arith.constant 0.000000e+00 : f32
    %1 = vector.broadcast %cst : f32 to vector<4x128xf32>
    %2 = arith.mulf %0, %1 : vector<4x128xf32>
    %c0_1 = arith.constant 0 : index
    %c0_2 = arith.constant 0 : index
    %3 = vector.load %arg2[%c0_1, %c0_2] : memref<4x128xf32, #tpu.memory_space<vmem>>, vector<4x128xf32>
    tpu.vector_store %arg2[%c0_1, %c0_2], %2 {strides = array<i32>} : memref<4x128xf32, #tpu.memory_space<vmem>>, vector<4x128xf32>,
    return
  }
  func.func @transform_0(%arg0: i32) -> (i32, i32) {
    %c0_i32 = arith.constant 0 : i32
    %c0_i32_0 = arith.constant 0 : i32
    return %arg0, %c0_i32 : i32, i32
  }
  func.func @transform_1(%arg0: i32) -> (i32, i32) {
    %c0_i32 = arith.constant 0 : i32
    %c0_i32_0 = arith.constant 0 : i32
    return %arg0, %c0_i32 : i32, i32
  }
}

</mosaic_0001>

<llo_original>
// kernel: tpu_custom_call.1
$region0: #{tpu_custom_call.1}
  #allocation0 [shape = 'u32[]', space=smem, size = 0x4, offset = 0x4, fixed_abs, tag = 'smem constant byte address 0x4 - core index']
  #allocation1 [shape = 'u32[144,128]{1,0:T(1,128)}', space=vmem, size = 0x12000, scoped, tag = 'internal scratch']
  %s0 = inlined_call_operand.hbm [shape: f32[4,128], index: 0, kind: input, shape index: {}]
  %s1 = inlined_call_operand.hbm [shape: f32[4,128], index: 1, kind: output, shape index: {}]
  %s2 = sld [smem:[#allocation0]]
  $region18: #{tpu_custom_call.1} parent=0
    _
  %s4 = ssub.s32 1, %s2
  %s5 = scalar_select 0, %s4, %s2
  $region1: #{tpu_custom_call.1} parent=0
    #allocation2 [shape = 'u8[2048]{0}', space=vmem, size = 0x800, scoped, tag = 'input window, operand 0, single buffered']
    #allocation3 [shape = 's32[1]{0}', space=sflag, size = 0x4, scoped, tag = 'scoped memory for tpu_custom_call.1']
    #allocation4 [shape = 's32[1]{0}', space=sflag, size = 0x4, scoped, tag = 'scoped memory for tpu_custom_call.1']
    #allocation5 [shape = 'u8[2048]{0}', space=vmem, size = 0x800, scoped, tag = 'output window, operand 0, single buffered']
    %6 = vsyncpa [#allocation3], 0
    %7 = vsyncpa [#allocation4], 0
    // Predicated region
    $region2: #{tpu_custom_call.1} parent=1 // pred_check
      _
    $region3: #{tpu_custom_call.1} parent=1 // pred_check_branch
      %9 = sbr.rel (0) target = $region5
    $region4: #{tpu_custom_call.1} parent=1 // pred_region
      %s11 = ssub.s32 64, 64
      %12 = vsyncadd [#allocation3], %s11
      %s14 = sshll.u32 [#allocation2], 4
      %s15 = int_to_ptr.vmem [resolvable:$true] %s14
      %17 = dma.hbm_to_vmem [thread:$0]  %s0, 64, %s15, [#allocation3]
    $region5: #{tpu_custom_call.1} parent=1 // pred_fallthru
      _
    // Predicated region
    $region6: #{tpu_custom_call.1} parent=1 // pred_check
      _
    $region7: #{tpu_custom_call.1} parent=1 // pred_check_branch
      %19 = sbr.rel (0) target = $region9
    $region8: #{tpu_custom_call.1} parent=1 // pred_region
      %20 = dma.done [#allocation3], 64
    $region9: #{tpu_custom_call.1} parent=1 // pred_fallthru
      _
    %v21 = vld [vmem:[#allocation2] sm:$0xf]
    %v22 = vmul.f32 %v21, 0.0
    %23 = vst [vmem:[#allocation5] sm:$0xf] %v22
    // Predicated region
    $region10: #{tpu_custom_call.1} parent=1 // pred_check
      _
    $region11: #{tpu_custom_call.1} parent=1 // pred_check_branch
      %25 = sbr.rel (0) target = $region13
    $region12: #{tpu_custom_call.1} parent=1 // pred_region
      %s27 = ssub.s32 64, 64
      %28 = vsyncadd [#allocation4], %s27
      %s30 = sshll.u32 [#allocation5], 4
      %s31 = int_to_ptr.vmem [resolvable:$true] %s30
      %33 = dma.vmem_to_hbm [thread:$0]  %s31, 64, %s1, [#allocation4]
    $region13: #{tpu_custom_call.1} parent=1 // pred_fallthru
      _
    // Predicated region
    $region14: #{tpu_custom_call.1} parent=1 // pred_check
      _
    $region15: #{tpu_custom_call.1} parent=1 // pred_check_branch
      %35 = sbr.rel (0) target = $region17
    $region16: #{tpu_custom_call.1} parent=1 // pred_region
      %36 = dma.done [#allocation4], 64
    $region17: #{tpu_custom_call.1} parent=1 // pred_fallthru
      _
    %37 = vsyncpa [#allocation3], 1
    %38 = vsyncpa [#allocation4], 1

</llo_original>
